<compile_context>
chip_gen: v7x
topology: tpu7x:2x2x1
jax: 0.10.0
libtpu: 0.0.40
codegen_flags: <defaults>
</compile_context>

<pallas_src>
import functools

import jax
import jax.numpy as jnp
from jax.experimental import pallas as pl
from jax.experimental.pallas import tpu as pltpu


def _round_up(x: int, m: int) -> int:
    return ((x + m - 1) // m) * m


def _tpu_tile_policy():
    """Per-generation tile caps, MXU alignment and VMEM budget."""
    try:
        kind = jax.devices()[0].device_kind.lower()
    except Exception:  # pragma: no cover - defensive only
        kind = ""
    if "v7" in kind:
        # 64 MiB VMEM per TensorCore, 2 TCs/chip, 256x256 MXU.
        return dict(tm_cap=512, tn_cap=512, mxu_align=256, num_tc=2,
                    scoped_default=32 << 20, vmem_cap=40 << 20)
    if "v6" in kind:
        # 128 MiB VMEM, 1 TC, 256x256 MXU: wider N tiles halve A re-streaming.
        return dict(tm_cap=512, tn_cap=1024, mxu_align=256, num_tc=1,
                    scoped_default=32 << 20, vmem_cap=96 << 20)
    if "v5" in kind:
        # 128 MiB VMEM, 1 TC, 128x128 MXU.
        return dict(tm_cap=512, tn_cap=1024, mxu_align=128, num_tc=1,
                    scoped_default=16 << 20, vmem_cap=64 << 20)
    # Unknown / future generation: conservative (v7x-like) defaults.
    return dict(tm_cap=512, tn_cap=512, mxu_align=128, num_tc=2,
                scoped_default=16 << 20, vmem_cap=40 << 20)


def _matmul_kernel_f32out(a_ref, b_ref, o_ref):
    """f32 output: accumulate directly into the (k-resident) output block."""
    @pl.when(pl.program_id(2) == 0)
    def _():
        o_ref[...] = jnp.zeros_like(o_ref)

    o_ref[...] += jnp.dot(
        a_ref[...], b_ref[...], preferred_element_type=jnp.float32
    )


def _matmul_kernel_acc(a_ref, b_ref, o_ref, acc_ref):
    """Narrow output dtype: accumulate in an f32 VMEM scratch, cast at end."""
    @pl.when(pl.program_id(2) == 0)
    def _():
        acc_ref[...] = jnp.zeros_like(acc_ref)

    acc_ref[...] += jnp.dot(
        a_ref[...], b_ref[...], preferred_element_type=jnp.float32
    )

    @pl.when(pl.program_id(2) == pl.num_programs(2) - 1)
    def _():
        o_ref[...] = acc_ref[...].astype(o_ref.dtype)


@functools.partial(jax.jit, static_argnames=("tm", "tn", "tk"))
def matmul(a, b, *, tm=None, tn=None, tk=None):
    M, K = a.shape
    K2, N = b.shape
    assert K == K2, f"inner dims must match, got {K} vs {K2}"

    out_dtype = jnp.result_type(a.dtype, b.dtype)
    if not jnp.issubdtype(out_dtype, jnp.floating):
        # TODO(synk): integer matmul (exact int accumulation, no int MXU path
        # on v7x) is left to XLA to preserve torch.mm semantics exactly.
        return jnp.dot(a, b)

    pol = _tpu_tile_policy()
    a_item = jnp.dtype(a.dtype).itemsize
    b_item = jnp.dtype(b.dtype).itemsize
    o_item = jnp.dtype(out_dtype).itemsize
    sublane = max(8, 32 // max(1, a_item))     # 8 f32 / 16 bf16 / 32 int8

    # ---- M tile: MXU/dtype aligned; never padded (ragged tiles are masked).
    if tm is None:
        if M >= pol["tm_cap"]:
            tm = pol["tm_cap"]
        elif M >= pol["mxu_align"]:
            tm = min(_round_up(M, pol["mxu_align"]), pol["tm_cap"])
        else:
            tm = _round_up(M, sublane)

    # ---- N tile: lane-dense (multiple of 128), generation-sized cap.
    if tn is None:
        tn = pol["tn_cap"] if N >= pol["tn_cap"] else _round_up(N, 128)

    # On 2-TC chips make sure there are >=2 parallel output tiles when the
    # whole problem would otherwise be a single (i, j) tile.
    if (pol["num_tc"] >= 2 and pl.cdiv(M, tm) == 1 and pl.cdiv(N, tn) == 1
            and N > 256):
        tn = _round_up(pl.cdiv(N, 2), 128)

    # ---- K tile: scales with input dtype width; a single full-extent block
    #      when it fits, so the common case needs no padding at all.
    if tk is None:
        tk_cap = (4 * 1024) // max(a_item, b_item)   # 1024 f32 / 2048 bf16
        if K <= tk_cap:
            tk = K
        else:
            nk = pl.cdiv(K, tk_cap)
            tk = _round_up(pl.cdiv(K, nk), 128)

    # ---- Pad K only (partial reduction tiles would feed garbage into the
    #      accumulator).  M/N stay ragged; Pallas masks their writeback.
    Kp = _round_up(K, tk)
    if Kp != K:
        a = jnp.pad(a, ((0, 0), (0, Kp - K)))
        b = jnp.pad(b, ((0, Kp - K), (0, 0)))

    grid = (pl.cdiv(M, tm), pl.cdiv(N, tn), Kp // tk)

    use_scratch = out_dtype != jnp.float32
    kernel = _matmul_kernel_acc if use_scratch else _matmul_kernel_f32out
    scratch_shapes = [pltpu.VMEM((tm, tn), jnp.float32)] if use_scratch else []

    # ---- Only raise the scoped-VMEM limit when the double-buffered tile
    #      footprint actually needs it (no floor; generation-aware cap).
    footprint = (
        2 * tm * tk * a_item
        + 2 * tk * tn * b_item
        + 2 * tm * tn * o_item
        + (tm * tn * 4 if use_scratch else 0)
    )
    needed = footprint * 3 // 2
    vmem_limit = (int(min(needed, pol["vmem_cap"]))
                  if needed > pol["scoped_default"] else None)

    cost = pl.CostEstimate(
        flops=2 * M * N * K,
        transcendentals=0,
        bytes_accessed=M * K * a_item + K * N * b_item + M * N * o_item,
    )

    return pl.pallas_call(
        kernel,
        out_shape=jax.ShapeDtypeStruct((M, N), out_dtype),
        grid_spec=pltpu.PrefetchScalarGridSpec(
            num_scalar_prefetch=0,
            grid=grid,
            in_specs=[
                pl.BlockSpec((tm, tk), lambda i, j, k: (i, k)),
                pl.BlockSpec((tk, tn), lambda i, j, k: (k, j)),
            ],
            out_specs=pl.BlockSpec((tm, tn), lambda i, j, k: (i, j)),
            scratch_shapes=scratch_shapes,
        ),
        compiler_params=pltpu.CompilerParams(
            dimension_semantics=("parallel", "parallel", "arbitrary"),
            vmem_limit_bytes=vmem_limit,
        ),
        cost_estimate=cost,
    )(a, b)


if __name__ == "__main__":
    key = jax.random.PRNGKey(0)
    ka, kb, kc, kd = jax.random.split(key, 4)

    # Small shapes consistent with torch.mm(a, b): a (M, K), b (K, N).
    M, K, N = 8, 32, 16
    a = jax.random.normal(ka, (M, K), dtype=jnp.float32)
    b = jax.random.normal(kb, (K, N), dtype=jnp.float32)
    out = jax.block_until_ready(matmul(a, b))
    ref = a @ b
    assert out.shape == (M, N)
    assert jnp.allclose(out, ref, atol=1e-5, rtol=1e-5), "mismatch (small f32)"

    # Ragged M/N + multi-step K reduction with K padding (no M/N padding).
    M2, K2_, N2 = 250, 600, 384
    a2 = jax.random.normal(kc, (M2, K2_), dtype=jnp.float32)
    b2 = jax.random.normal(kd, (K2_, N2), dtype=jnp.float32)
    out2 = jax.block_until_ready(matmul(a2, b2, tk=256))
    ref2 = a2 @ b2
    assert out2.shape == (M2, N2)
    assert jnp.allclose(out2, ref2, atol=2e-2, rtol=1e-3), "mismatch (tiled f32)"

    # bf16 inputs exercise the f32-scratch accumulation + final-cast path.
    a3 = jax.random.normal(ka, (64, 128), dtype=jnp.bfloat16)
    b3 = jax.random.normal(kb, (128, 96), dtype=jnp.bfloat16)
    out3 = jax.block_until_ready(matmul(a3, b3))
    ref3 = jnp.dot(a3.astype(jnp.float32), b3.astype(jnp.float32))
    assert out3.shape == (64, 96)
    assert jnp.allclose(out3.astype(jnp.float32), ref3, atol=1.0, rtol=5e-2), \
        "mismatch (bf16)"

    print("KERNEL_OK")
</pallas_src>

<mosaic_0001>
module attributes {stable_mosaic.version = 11 : i64} {
  func.func @_matmul_kernel_f32out(%arg0: i32, %arg1: i32, %arg2: i32, %arg3: memref<8x32xf32, #tpu.memory_space<vmem>>, %arg4: memref<32x128xf32, #tpu.memory_space<vmem>>, %arg5: memref<8x128xf32, #tpu.memory_space<vmem>>) attributes {dimension_semantics = [#tpu.dimension_semantics<parallel>, #tpu.dimension_semantics<parallel>, #tpu.dimension_semantics<arbitrary>], iteration_bounds = array<i64: 1, 1, 1>, scalar_prefetch = 0 : i64, scratch_operands = 0 : i64, tpu.core_type = #tpu.core_type<tc>, window_params = [{transform_indices = @transform_0, window_bounds = array<i64: 8, 32>}, {transform_indices = @transform_1, window_bounds = array<i64: 32, 128>}, {transform_indices = @transform_2, window_bounds = array<i64: 8, 128>}]} {
    %c0_i32 = arith.constant 0 : i32
    %0 = arith.cmpi eq, %arg2, %c0_i32 : i32
    %1 = arith.extui %0 : i1 to i32
    %c0_i32_0 = arith.constant 0 : i32
    %2 = arith.cmpi ne, %1, %c0_i32_0 : i32
    scf.if %2 {
      %cst_8 = arith.constant 0.000000e+00 : f32
      %9 = vector.broadcast %cst_8 : f32 to vector<8x128xf32>
      %c0_9 = arith.constant 0 : index
      %c0_10 = arith.constant 0 : index
      %10 = vector.load %arg5[%c0_9, %c0_10] : memref<8x128xf32, #tpu.memory_space<vmem>>, vector<8x128xf32>
      tpu.vector_store %arg5[%c0_9, %c0_10], %9 {strides = array<i32>} : memref<8x128xf32, #tpu.memory_space<vmem>>, vector<8x128xf32>,
    } else {
    }
    %c0 = arith.constant 0 : index
    %c0_1 = arith.constant 0 : index
    %3 = vector.load %arg5[%c0, %c0_1] : memref<8x128xf32, #tpu.memory_space<vmem>>, vector<8x128xf32>
    %c0_2 = arith.constant 0 : index
    %c0_3 = arith.constant 0 : index
    %4 = vector.load %arg3[%c0_2, %c0_3] : memref<8x32xf32, #tpu.memory_space<vmem>>, vector<8x32xf32>
    %c0_4 = arith.constant 0 : index
    %c0_5 = arith.constant 0 : index
    %5 = vector.load %arg4[%c0_4, %c0_5] : memref<32x128xf32, #tpu.memory_space<vmem>>, vector<32x128xf32>
    %cst = arith.constant dense<0.000000e+00> : vector<8x128xf32>
    %6 = tpu.matmul %4, %5, %cst {dimension_numbers = #tpu.dot_dimension_numbers<[1], [0], [0], [1], [0, 0, 1, 1], [], []>} : vector<8x32xf32>, vector<32x128xf32>, vector<8x128xf32> -> vector<8x128xf32>
    %7 = arith.addf %3, %6 : vector<8x128xf32>
    %c0_6 = arith.constant 0 : index
    %c0_7 = arith.constant 0 : index
    %8 = vector.load %arg5[%c0_6, %c0_7] : memref<8x128xf32, #tpu.memory_space<vmem>>, vector<8x128xf32>
    tpu.vector_store %arg5[%c0_6, %c0_7], %7 {strides = array<i32>} : memref<8x128xf32, #tpu.memory_space<vmem>>, vector<8x128xf32>,
    return
  }
  func.func @transform_0(%arg0: i32, %arg1: i32, %arg2: i32) -> (i32, i32) {
    %c0_i32 = arith.constant 0 : i32
    return %arg0, %arg2 : i32, i32
  }
  func.func @transform_1(%arg0: i32, %arg1: i32, %arg2: i32) -> (i32, i32) {
    %c0_i32 = arith.constant 0 : i32
    return %arg2, %arg1 : i32, i32
  }
  func.func @transform_2(%arg0: i32, %arg1: i32, %arg2: i32) -> (i32, i32) {
    %c0_i32 = arith.constant 0 : i32
    return %arg0, %arg1 : i32, i32
  }
}

</mosaic_0001>

<llo_original>
// kernel: matmul.1
$region0: #{matmul.1}
  #allocation0 [shape = 'u32[]', space=smem, size = 0x4, offset = 0x4, fixed_abs, tag = 'smem constant byte address 0x4 - core index']
  #allocation1 [shape = 'u32[144,128]{1,0:T(1,128)}', space=vmem, size = 0x12000, scoped, tag = 'internal scratch']
  %s0 = inlined_call_operand.vmem [shape: f32[8,32], index: 0, kind: input, shape index: {}]
  %s1 = inlined_call_operand.vmem [shape: f32[32,16], index: 1, kind: input, shape index: {}]
  %s2 = inlined_call_operand.hbm [shape: f32[8,16], index: 2, kind: output, shape index: {}]
  %s3 = sld [smem:[#allocation0]]
  $region22: #{matmul.1} parent=0
    _
  %s5 = ssub.s32 1, %s3
  %s6 = scalar_select 0, %s5, %s3
  $region1: #{matmul.1} parent=0
    #allocation2 [shape = 'u8[4096]{0}', space=vmem, size = 0x1000, scoped, tag = 'output window, operand 0, single buffered']
    #allocation3 [shape = 's32[1]{0}', space=sflag, size = 0x4, scoped, tag = 'scoped memory for matmul.1']
    %7 = vsyncpa [#allocation3], 0
    // Predicated region
    $region2: #{matmul.1} parent=1 // pred_check
      _
    $region3: #{matmul.1} parent=1 // pred_check_branch
      %9 = sbr.rel (0) target = $region5
    $region4: #{matmul.1} parent=1 // pred_region
      _
    $region5: #{matmul.1} parent=1 // pred_fallthru
      _
    // Predicated region
    $region6: #{matmul.1} parent=1 // pred_check
      _
    $region7: #{matmul.1} parent=1 // pred_check_branch
      %11 = sbr.rel (0) target = $region9
    $region8: #{matmul.1} parent=1 // pred_region
      _
    $region9: #{matmul.1} parent=1 // pred_fallthru
      _
    %p12 = scmp.eq.s32.totalorder 0, 0
    // Predicated region
    $region10: #{matmul.1} parent=1 // pred_check
      %p13 = pneg %p12
    $region11: #{matmul.1} parent=1 // pred_check_branch
      %15 = sbr.rel (%p13) target = $region13
    $region12: #{matmul.1} parent=1 // pred_region
      %16 = vst [vmem:[#allocation2] sm:$0xff] 0.0
    $region13: #{matmul.1} parent=1 // pred_fallthru
      _
    %v17 = vld [vmem:[#allocation2] sm:$0xff]
    %v18 = vld [vmem:[%s0] sm:$0xff]
    %v19 = vld [vmem:[%s1] sm:$0xff]
    %v20 = vld [vmem:[%s1 + $0x8] sm:$0xff]
    %v21 = vld [vmem:[%s1 + $0x10] sm:$0xff]
    %v22 = vld [vmem:[%s1 + $0x18] sm:$0xff]
    %vm23 = vcmask 261120
    %v25 = vsel %vm23, %v18, 0
    %27 = vmatprep.subr.mxu0 0.0
    %28 = vmatpush1.msra.mxu0 %v19
    %29 = vmatprep.subr.mxu0 0.0
    %30 = vmatpush1.msra.mxu0 %v20
    %31 = vmatprep.subr.mxu0 0.0
    %32 = vmatpush1.msra.mxu0 %v21
    %33 = vmatprep.subr.mxu0 0.0
    %34 = vmatpush1.msra.mxu0 %v22
    %35 = vmatprep.subr.mxu0 0.0
    %36 = vmatpush1.msra.mxu0 0.0
    %37 = vmatprep.subr.mxu0 0.0
    %38 = vmatpush1.msra.mxu0 0.0
    %39 = vmatprep.subr.mxu0 0.0
    %40 = vmatpush1.msra.mxu0 0.0
    %41 = vmatprep.subr.mxu0 0.0
    %42 = vmatpush1.msra.mxu0 0.0
    %43 = vmatprep.subr.mxu0 0.0
    %44 = vmatpush1.msra.mxu0 0.0
    %45 = vmatprep.subr.mxu0 0.0
    %46 = vmatpush1.msra.mxu0 0.0
    %47 = vmatprep.subr.mxu0 0.0
    %48 = vmatpush1.msra.mxu0 0.0
    %49 = vmatprep.subr.mxu0 0.0
    %50 = vmatpush1.msra.mxu0 0.0
    %51 = vmatprep.subr.mxu0 0.0
    %52 = vmatpush1.msra.mxu0 0.0
    %53 = vmatprep.subr.mxu0 0.0
    %54 = vmatpush1.msra.mxu0 0.0
    %55 = vmatprep.subr.mxu0 0.0
    %56 = vmatpush1.msra.mxu0 0.0
    %57 = vmatprep.subr.mxu0 0.0
    %58 = vmatpush1.msra.mxu0 0.0
    %59 = vmatprep.subr.mxu0 0.0
    %60 = vmatpush1.msra.mxu0 0.0
    %61 = vmatprep.subr.mxu0 0.0
    %62 = vmatpush1.msra.mxu0 0.0
    %63 = vmatprep.subr.mxu0 0.0
    %64 = vmatpush1.msra.mxu0 0.0
    %65 = vmatprep.subr.mxu0 0.0
    %66 = vmatpush1.msra.mxu0 0.0
    %67 = vmatprep.subr.mxu0 0.0
    %68 = vmatpush1.msra.mxu0 0.0
    %69 = vmatprep.subr.mxu0 0.0
    %70 = vmatpush1.msra.mxu0 0.0
    %71 = vmatprep.subr.mxu0 0.0
    %72 = vmatpush1.msra.mxu0 0.0
    %73 = vmatprep.subr.mxu0 0.0
    %74 = vmatpush1.msra.mxu0 0.0
    %75 = vmatprep.subr.mxu0 0.0
    %76 = vmatpush1.msra.mxu0 0.0
    %77 = vmatprep.subr.mxu0 0.0
    %78 = vmatpush1.msra.mxu0 0.0
    %79 = vmatprep.subr.mxu0 0.0
    %80 = vmatpush1.msra.mxu0 0.0
    %81 = vmatprep.subr.mxu0 0.0
    %82 = vmatpush1.msra.mxu0 0.0
    %83 = vmatprep.subr.mxu0 0.0
    %84 = vmatpush1.msra.mxu0 0.0
    %85 = vmatprep.subr.mxu0 0.0
    %86 = vmatpush1.msra.mxu0 0.0
    %87 = vmatprep.subr.mxu0 0.0
    %88 = vmatpush1.msra.mxu0 0.0
    %89 = vmatprep.subr.mxu0 0.0
    %90 = vmatpush1.msra.mxu0 0.0
    %91 = vmatprep.mubr.f32.mxu0 0.0
    %92 = vmatmul.mubr.f32.gmra.mrb[0].mxu0 %v25
    %v93 = vpop.f32.mrb[0].mxu0
    %v94 = vadd.f32 0.0, %v93
    %v95 = vpop.f32.mrb[0].mxu0
    %96 = vdwg.mxu0
    %v97 = vadd.f32 %v17, %v94
    %98 = vst [vmem:[#allocation2] sm:$0xff] %v97
    // Predicated region
    $region14: #{matmul.1} parent=1 // pred_check
      _
    $region15: #{matmul.1} parent=1 // pred_check_branch
      %100 = sbr.rel (0) target = $region17
    $region16: #{matmul.1} parent=1 // pred_region
      %s102 = ssub.s32 128, 128
      %103 = vsyncadd [#allocation3], %s102
      %s105 = sshll.u32 [#allocation2], 4
      %s106 = int_to_ptr.vmem [resolvable:$true] %s105
      %108 = dma.vmem_to_hbm [thread:$0]  %s106, 128, %s2, [#allocation3]
    $region17: #{matmul.1} parent=1 // pred_fallthru
      _
    // Predicated region
    $region18: #{matmul.1} parent=1 // pred_check
      _
    $region19: #{matmul.1} parent=1 // pred_check_branch
      %110 = sbr.rel (0) target = $region21
    $region20: #{matmul.1} parent=1 // pred_region
      %111 = dma.done [#allocation3], 128
    $region21: #{matmul.1} parent=1 // pred_fallthru
      _
    %112 = vsyncpa [#allocation3], 1

</llo_original>
